<compile_context>
chip_gen: v7x
topology: tpu7x:2x2x1
jax: 0.10.0
libtpu: 0.0.40
codegen_flags: <defaults>
</compile_context>

<pallas_src>
import jax
import jax.numpy as jnp
from jax import lax
from jax.experimental import pallas as pl
from jax.experimental.pallas import tpu as pltpu


def _round_up(n, m):
    return (n + m - 1) // m * m


def _top_net_kernel(x_ref, w_ref, b_ref, o_ref):
    # x_ref: (TILE_B, F)    VMEM  -- one batch tile (input dtype: f32 or bf16)
    # w_ref: (1, F)         VMEM  -- PyTorch Linear weight layout (no transpose)
    # b_ref: (1,)     f32   SMEM  -- scalar bias
    # o_ref: (1, 1, TILE_B) f32   VMEM -- lane-dense probabilities for this tile
    logits = lax.dot_general(
        w_ref[...], x_ref[...],
        dimension_numbers=(((1,), (1,)), ((), ())),   # contract the F axis
        preferred_element_type=jnp.float32,
    )                                                  # (1, TILE_B), f32 accumulate
    o_ref[0] = jax.nn.sigmoid(logits + b_ref[0])       # EUP sigmoid, unmasked vst


def top_net_forward(x, weight, bias, *, tile_b=2048):
    """x: (B, F) f32/bf16; weight: (1, F) (PyTorch layout); bias: (1,) -> (B, 1) f32."""
    B, F = x.shape
    assert weight.shape == (1, F)

    # Lane-dense (multiple of 128) batch tile; don't over-pad tiny batches.
    tile_b = max(128, min(_round_up(tile_b, 128), _round_up(B, 128)))
    num_tiles = pl.cdiv(B, tile_b)

    w = weight.astype(x.dtype)                      # 40 elements: negligible
    b = jnp.asarray(bias, dtype=jnp.float32).reshape(1)

    itemsize = jnp.dtype(x.dtype).itemsize
    cost = pl.CostEstimate(
        flops=2 * B * F,
        transcendentals=B,
        bytes_accessed=B * F * itemsize + F * itemsize + 4 + B * 4,
    )

    out = pl.pallas_call(
        _top_net_kernel,
        out_shape=jax.ShapeDtypeStruct((num_tiles, 1, tile_b), jnp.float32),
        grid=(num_tiles,),
        in_specs=[
            pl.BlockSpec((tile_b, F), lambda i: (i, 0)),
            pl.BlockSpec((1, F), lambda i: (0, 0)),
            pl.BlockSpec(memory_space=pltpu.MemorySpace.SMEM),
        ],
        out_specs=pl.BlockSpec((1, 1, tile_b), lambda i: (i, 0, 0)),
        compiler_params=pltpu.CompilerParams(
            dimension_semantics=("parallel",),  # independent batch tiles (v7x megacore)
        ),
        cost_estimate=cost,
    )(x, w, b)

    # Garbage columns from the (masked) boundary over-run are sliced off here.
    return out.reshape(num_tiles * tile_b)[:B].reshape(B, 1)


def init_top_net_params(key, client_num):
    """torch.nn.Linear default init (uniform +-1/sqrt(fan_in)), then clamp
    weights to [0, 1] as in the module's __init__."""
    in_features = client_num * 20
    k_w, k_b = jax.random.split(key)
    bound = 1.0 / jnp.sqrt(jnp.float32(in_features))
    weight = jax.random.uniform(
        k_w, (1, in_features), dtype=jnp.float32, minval=-bound, maxval=bound
    )
    weight = jnp.clip(weight, 0.0, 1.0)  # torch.clamp(self.layer2.weight.data, 0, 1)
    bias = jax.random.uniform(
        k_b, (1,), dtype=jnp.float32, minval=-bound, maxval=bound
    )
    return weight, bias


if __name__ == "__main__":
    key = jax.random.PRNGKey(0)
    k_params, k_x, k_x2, k_x3 = jax.random.split(key, 4)

    client_num = 2                 # small, consistent with the module
    batch = 8
    in_features = client_num * 20  # 40

    weight, bias = init_top_net_params(k_params, client_num)

    # Small-shape run (single partial tile, no wrapper padding).
    x = jax.random.normal(k_x, (batch, in_features), dtype=jnp.float32)
    y = top_net_forward(x, weight, bias)
    jax.block_until_ready(y)
    y_ref = jax.nn.sigmoid(x @ weight.T + bias)
    assert y.shape == (batch, 1)
    assert jnp.allclose(y, y_ref, atol=1e-5, rtol=1e-5)

    # Multi-tile run with a remainder tile (exercises masked boundary DMA + slice).
    batch2 = 300
    x2 = jax.random.normal(k_x2, (batch2, in_features), dtype=jnp.float32)
    y2 = top_net_forward(x2, weight, bias, tile_b=128)
    jax.block_until_ready(y2)
    y2_ref = jax.nn.sigmoid(x2 @ weight.T + bias)
    assert y2.shape == (batch2, 1)
    assert jnp.allclose(y2, y2_ref, atol=1e-5, rtol=1e-5)

    # bf16-input path: bf16 DMA, f32 accumulation/sigmoid inside the kernel.
    x3 = jax.random.normal(k_x3, (batch2, in_features), dtype=jnp.float32)
    y3 = top_net_forward(x3.astype(jnp.bfloat16), weight, bias)
    jax.block_until_ready(y3)
    y3_ref = jax.nn.sigmoid(
        x3.astype(jnp.bfloat16).astype(jnp.float32) @ weight.T + bias
    )
    assert y3.shape == (batch2, 1)
    assert jnp.allclose(y3, y3_ref, atol=2e-2, rtol=2e-2)

    print("KERNEL_OK")
</pallas_src>

<mosaic_0001>
module attributes {stable_mosaic.version = 11 : i64} {
  func.func @_top_net_kernel(%arg0: i32, %arg1: memref<128x40xf32, #tpu.memory_space<vmem>>, %arg2: memref<1x40xf32, #tpu.memory_space<vmem>>, %arg3: memref<1xf32, #tpu.memory_space<smem>>, %arg4: memref<1x1x128xf32, #tpu.memory_space<vmem>>) attributes {dimension_semantics = [#tpu.dimension_semantics<parallel>], iteration_bounds = array<i64: 1>, scalar_prefetch = 0 : i64, scratch_operands = 0 : i64, tpu.core_type = #tpu.core_type<tc>, window_params = [{transform_indices = @transform_0, window_bounds = array<i64: 128, 40>}, {pipeline_mode = #tpu.pipeline_mode<synchronous>, transform_indices = @transform_1, window_bounds = array<i64: 1, 40>}, {transform_indices = @transform_2, window_bounds = array<i64: 1>}, {transform_indices = @transform_3, window_bounds = array<i64: 1, 1, 128>}]} {
    %c0 = arith.constant 0 : index
    %c0_0 = arith.constant 0 : index
    %0 = vector.load %arg2[%c0, %c0_0] : memref<1x40xf32, #tpu.memory_space<vmem>>, vector<1x40xf32>
    %c0_1 = arith.constant 0 : index
    %c0_2 = arith.constant 0 : index
    %1 = vector.load %arg1[%c0_1, %c0_2] : memref<128x40xf32, #tpu.memory_space<vmem>>, vector<128x40xf32>
    %cst = arith.constant dense<0.000000e+00> : vector<1x128xf32>
    %2 = tpu.matmul %0, %1, %cst {dimension_numbers = #tpu.dot_dimension_numbers<[1], [1], [0], [0], [0, 0, 1, 0], [], []>} : vector<1x40xf32>, vector<128x40xf32>, vector<1x128xf32> -> vector<1x128xf32>
    %c0_3 = arith.constant 0 : index
    %3 = memref.load %arg3[%c0_3] : memref<1xf32, #tpu.memory_space<smem>>
    %4 = vector.broadcast %3 : f32 to vector<1x128xf32>
    %5 = arith.addf %2, %4 : vector<1x128xf32>
    %6 = arith.negf %5 : vector<1x128xf32>
    %7 = math.exp %6 : vector<1x128xf32>
    %cst_4 = arith.constant 1.000000e+00 : f32
    %8 = vector.broadcast %cst_4 : f32 to vector<1x128xf32>
    %9 = arith.addf %8, %7 : vector<1x128xf32>
    %10 = arith.divf %8, %9 : vector<1x128xf32>
    %c0_5 = arith.constant 0 : index
    %c0_6 = arith.constant 0 : index
    %c0_7 = arith.constant 0 : index
    %11 = vector.load %arg4[%c0_5, %c0_6, %c0_7] : memref<1x1x128xf32, #tpu.memory_space<vmem>>, vector<1x1x128xf32>
    %12 = vector.shape_cast %11 : vector<1x1x128xf32> to vector<1x128xf32>
    %13 = vector.shape_cast %10 : vector<1x128xf32> to vector<1x1x128xf32>
    tpu.vector_store %arg4[%c0_5, %c0_6, %c0_7], %13 {strides = array<i32>} : memref<1x1x128xf32, #tpu.memory_space<vmem>>, vector<1x1x128xf32>,
    return
  }
  func.func @transform_0(%arg0: i32) -> (i32, i32) {
    %c0_i32 = arith.constant 0 : i32
    %c0_i32_0 = arith.constant 0 : i32
    return %arg0, %c0_i32 : i32, i32
  }
  func.func @transform_1(%arg0: i32) -> (i32, i32) {
    %c0_i32 = arith.constant 0 : i32
    %c0_i32_0 = arith.constant 0 : i32
    %c0_i32_1 = arith.constant 0 : i32
    return %c0_i32, %c0_i32_0 : i32, i32
  }
  func.func @transform_2(%arg0: i32) -> i32 {
    %c0_i32 = arith.constant 0 : i32
    %c0_i32_0 = arith.constant 0 : i32
    return %c0_i32 : i32
  }
  func.func @transform_3(%arg0: i32) -> (i32, i32, i32) {
    %c0_i32 = arith.constant 0 : i32
    %c0_i32_0 = arith.constant 0 : i32
    %c0_i32_1 = arith.constant 0 : i32
    return %arg0, %c0_i32, %c0_i32_0 : i32, i32, i32
  }
}

</mosaic_0001>

<llo_original>
// kernel: tpu_custom_call.1
$region0: #{tpu_custom_call.1}
  #allocation0 [shape = 'u32[]', space=smem, size = 0x4, offset = 0x4, fixed_abs, tag = 'smem constant byte address 0x4 - core index']
  #allocation1 [shape = 'u32[144,128]{1,0:T(1,128)}', space=vmem, size = 0x12000, scoped, tag = 'internal scratch']
  #allocation2 [shape = 'f32[1]{0:T(128)S(6)}', space=smem, size = 0x200, scoped, tag = 'scoped memory for tpu_custom_call.1']
  %s0 = inlined_call_operand.hbm [shape: f32[8,40], index: 0, kind: input, shape index: {}]
  %s1 = inlined_call_operand.vmem [shape: f32[1,40], index: 1, kind: input, shape index: {}]
  %s2 = inlined_call_operand.<no memory space> [shape: f32[1], index: 2, kind: input, shape index: {}]
  %s3 = inlined_call_operand.hbm [shape: f32[1,1,128], index: 3, kind: output, shape index: {}]
  %s4 = sld [smem:[#allocation0]]
  $region26: #{tpu_custom_call.1} parent=0
    _
  %s6 = ssub.s32 1, %s4
  %s7 = scalar_select 0, %s6, %s4
  %8 = sst [smem:[#allocation2]] %s2
  $region1: #{tpu_custom_call.1} parent=0
    #allocation3 [shape = 'u8[65536]{0}', space=vmem, size = 0x10000, scoped, tag = 'input window, operand 0, single buffered']
    #allocation4 [shape = 's32[1]{0}', space=sflag, size = 0x4, scoped, tag = 'scoped memory for tpu_custom_call.1']
    #allocation5 [shape = 's32[1]{0}', space=sflag, size = 0x4, scoped, tag = 'scoped memory for tpu_custom_call.1']
    #allocation6 [shape = 'u8[512]{0}', space=vmem, size = 0x400, scoped, tag = 'output window, operand 0, single buffered']
    %9 = vsyncpa [#allocation4], 0
    %10 = vsyncpa [#allocation5], 0
    // Predicated region
    $region2: #{tpu_custom_call.1} parent=1 // pred_check
      _
    $region3: #{tpu_custom_call.1} parent=1 // pred_check_branch
      %12 = sbr.rel (0) target = $region5
    $region4: #{tpu_custom_call.1} parent=1 // pred_region
      %s14 = ssub.s32 2048, 128
      %15 = vsyncadd [#allocation4], %s14
      %s16 = sshll.u32 [#allocation3], 4
      %s17 = int_to_ptr.vmem [resolvable:$true] %s16
      %22 = dma.hbm_to_vmem [thread:$0]  %s0, 128, %s17, [#allocation4], 128, 128, 8
    $region5: #{tpu_custom_call.1} parent=1 // pred_fallthru
      _
    // Predicated region
    $region6: #{tpu_custom_call.1} parent=1 // pred_check
      _
    $region7: #{tpu_custom_call.1} parent=1 // pred_check_branch
      %24 = sbr.rel (0) target = $region9
    $region8: #{tpu_custom_call.1} parent=1 // pred_region
      _
    $region9: #{tpu_custom_call.1} parent=1 // pred_fallthru
      _
    // Predicated region
    $region10: #{tpu_custom_call.1} parent=1 // pred_check
      _
    $region11: #{tpu_custom_call.1} parent=1 // pred_check_branch
      %26 = sbr.rel (0) target = $region13
    $region12: #{tpu_custom_call.1} parent=1 // pred_region
      _
    $region13: #{tpu_custom_call.1} parent=1 // pred_fallthru
      _
    // Predicated region
    $region14: #{tpu_custom_call.1} parent=1 // pred_check
      _
    $region15: #{tpu_custom_call.1} parent=1 // pred_check_branch
      %28 = sbr.rel (0) target = $region17
    $region16: #{tpu_custom_call.1} parent=1 // pred_region
      %29 = dma.done [#allocation4], 2048
    $region17: #{tpu_custom_call.1} parent=1 // pred_fallthru
      _
    %v30 = vld [vmem:[%s1] sm:$0x1]
    %v31 = vld [vmem:[#allocation3] sm:$0xff]
    %v32 = vld [vmem:[#allocation3 + $0x8] sm:$0xff]
    %v33 = vld [vmem:[#allocation3 + $0x10] sm:$0xff]
    %v34 = vld [vmem:[#allocation3 + $0x18] sm:$0xff]
    %v35 = vld [vmem:[#allocation3 + $0x20] sm:$0xff]
    %v36 = vld [vmem:[#allocation3 + $0x28] sm:$0xff]
    %v37 = vld [vmem:[#allocation3 + $0x30] sm:$0xff]
    %v38 = vld [vmem:[#allocation3 + $0x38] sm:$0xff]
    %v39 = vld [vmem:[#allocation3 + $0x40] sm:$0xff]
    %v40 = vld [vmem:[#allocation3 + $0x48] sm:$0xff]
    %v41 = vld [vmem:[#allocation3 + $0x50] sm:$0xff]
    %v42 = vld [vmem:[#allocation3 + $0x58] sm:$0xff]
    %v43 = vld [vmem:[#allocation3 + $0x60] sm:$0xff]
    %v44 = vld [vmem:[#allocation3 + $0x68] sm:$0xff]
    %v45 = vld [vmem:[#allocation3 + $0x70] sm:$0xff]
    %v46 = vld [vmem:[#allocation3 + $0x78] sm:$0xff]
    %s47 = sld [smem:[#allocation2]]
    %v48 = vstv %s47
    %vm49 = vcmask 326656
    %v51 = vsel %vm49, %v30, 0
    %v54 = vsel %vm49, %v31, 0
    %v57 = vsel %vm49, %v32, 0
    %v60 = vsel %vm49, %v33, 0
    %v63 = vsel %vm49, %v34, 0
    %v66 = vsel %vm49, %v35, 0
    %v69 = vsel %vm49, %v36, 0
    %v72 = vsel %vm49, %v37, 0
    %v75 = vsel %vm49, %v38, 0
    %v78 = vsel %vm49, %v39, 0
    %v81 = vsel %vm49, %v40, 0
    %v84 = vsel %vm49, %v41, 0
    %v87 = vsel %vm49, %v42, 0
    %v90 = vsel %vm49, %v43, 0
    %v93 = vsel %vm49, %v44, 0
    %v96 = vsel %vm49, %v45, 0
    %v99 = vsel %vm49, %v46, 0
    %101 = vmatprep.subr.mxu0 0.0
    %102 = vmatpush1.xpose.msra.mxu0 %v54
    %103 = vmatprep.subr.mxu0 0.0
    %104 = vmatpush1.xpose.msra.mxu0 %v57
    %105 = vmatprep.subr.mxu0 0.0
    %106 = vmatpush1.xpose.msra.mxu0 %v60
    %107 = vmatprep.subr.mxu0 0.0
    %108 = vmatpush1.xpose.msra.mxu0 %v63
    %109 = vmatprep.subr.mxu0 0.0
    %110 = vmatpush1.xpose.msra.mxu0 %v66
    %111 = vmatprep.subr.mxu0 0.0
    %112 = vmatpush1.xpose.msra.mxu0 %v69
    %113 = vmatprep.subr.mxu0 0.0
    %114 = vmatpush1.xpose.msra.mxu0 %v72
    %115 = vmatprep.subr.mxu0 0.0
    %116 = vmatpush1.xpose.msra.mxu0 %v75
    %117 = vmatprep.subr.mxu0 0.0
    %118 = vmatpush1.xpose.msra.mxu0 %v78
    %119 = vmatprep.subr.mxu0 0.0
    %120 = vmatpush1.xpose.msra.mxu0 %v81
    %121 = vmatprep.subr.mxu0 0.0
    %122 = vmatpush1.xpose.msra.mxu0 %v84
    %123 = vmatprep.subr.mxu0 0.0
    %124 = vmatpush1.xpose.msra.mxu0 %v87
    %125 = vmatprep.subr.mxu0 0.0
    %126 = vmatpush1.xpose.msra.mxu0 %v90
    %127 = vmatprep.subr.mxu0 0.0
    %128 = vmatpush1.xpose.msra.mxu0 %v93
    %129 = vmatprep.subr.mxu0 0.0
    %130 = vmatpush1.xpose.msra.mxu0 %v96
    %131 = vmatprep.subr.mxu0 0.0
    %132 = vmatpush1.xpose.msra.mxu0 %v99
    %133 = vmatprep.subr.mxu0 0.0
    %134 = vmatpush1.xpose.msra.mxu0 0.0
    %135 = vmatprep.subr.mxu0 0.0
    %136 = vmatpush1.xpose.msra.mxu0 0.0
    %137 = vmatprep.subr.mxu0 0.0
    %138 = vmatpush1.xpose.msra.mxu0 0.0
    %139 = vmatprep.subr.mxu0 0.0
    %140 = vmatpush1.xpose.msra.mxu0 0.0
    %141 = vmatprep.subr.mxu0 0.0
    %142 = vmatpush1.xpose.msra.mxu0 0.0
    %143 = vmatprep.subr.mxu0 0.0
    %144 = vmatpush1.xpose.msra.mxu0 0.0
    %145 = vmatprep.subr.mxu0 0.0
    %146 = vmatpush1.xpose.msra.mxu0 0.0
    %147 = vmatprep.subr.mxu0 0.0
    %148 = vmatpush1.xpose.msra.mxu0 0.0
    %149 = vmatprep.subr.mxu0 0.0
    %150 = vmatpush1.xpose.msra.mxu0 0.0
    %151 = vmatprep.subr.mxu0 0.0
    %152 = vmatpush1.xpose.msra.mxu0 0.0
    %153 = vmatprep.subr.mxu0 0.0
    %154 = vmatpush1.xpose.msra.mxu0 0.0
    %155 = vmatprep.subr.mxu0 0.0
    %156 = vmatpush1.xpose.msra.mxu0 0.0
    %157 = vmatprep.subr.mxu0 0.0
    %158 = vmatpush1.xpose.msra.mxu0 0.0
    %159 = vmatprep.subr.mxu0 0.0
    %160 = vmatpush1.xpose.msra.mxu0 0.0
    %161 = vmatprep.subr.mxu0 0.0
    %162 = vmatpush1.xpose.msra.mxu0 0.0
    %163 = vmatprep.subr.mxu0 0.0
    %164 = vmatpush1.xpose.msra.mxu0 0.0
    %165 = vmatprep.mubr.f32.mxu0 0.0
    %166 = vmatmul.mubr.f32.gmra.mrb[0].mxu0 %v51
    %v167 = vpop.f32.mrb[0].mxu0
    %v168 = vadd.f32 %v48, %v167
    %v169 = vpop.f32.mrb[0].mxu0
    %170 = vdwg.mxu0
    %v171 = vxor.u32 %v168, 2147483648
    %v172 = vmul.f32 %v171, 1.442695
    %v173 = vpow.pop %v172
    %v174 = vadd.f32 %v173, 1.0
    %v175 = vrcp.pop %v174
    %v176 = vmul.f32 1.0, %v175
    %177 = vst [vmem:[#allocation6] sm:$0x1] %v176
    // Predicated region
    $region18: #{tpu_custom_call.1} parent=1 // pred_check
      _
    $region19: #{tpu_custom_call.1} parent=1 // pred_check_branch
      %179 = sbr.rel (0) target = $region21
    $region20: #{tpu_custom_call.1} parent=1 // pred_region
      %s181 = ssub.s32 16, 16
      %182 = vsyncadd [#allocation5], %s181
      %s184 = sshll.u32 [#allocation6], 4
      %s185 = int_to_ptr.vmem [resolvable:$true] %s184
      %187 = dma.vmem_to_hbm [thread:$0]  %s185, 16, %s3, [#allocation5]
    $region21: #{tpu_custom_call.1} parent=1 // pred_fallthru
      _
    // Predicated region
    $region22: #{tpu_custom_call.1} parent=1 // pred_check
      _
    $region23: #{tpu_custom_call.1} parent=1 // pred_check_branch
      %189 = sbr.rel (0) target = $region25
    $region24: #{tpu_custom_call.1} parent=1 // pred_region
      %190 = dma.done [#allocation5], 16
    $region25: #{tpu_custom_call.1} parent=1 // pred_fallthru
      _
    %191 = vsyncpa [#allocation4], 1
    %192 = vsyncpa [#allocation5], 1

</llo_original>
